<compile_context>
chip_gen: v7x
topology: tpu7x:2x2x1
jax: 0.10.0
libtpu: 0.0.40
codegen_flags: <defaults>
</compile_context>

<pallas_src>
import functools

import jax
import jax.numpy as jnp
from jax.experimental import pallas as pl
from jax.experimental.pallas import tpu as pltpu

IN_EPS = 1e-3   # InstanceNorm2d eps (from the module)
BN_EPS = 1e-5   # BatchNorm2d default eps


def _diff_pool_kernel(x_ref, scale_ref, shift_ref, w_ref, b_ref, out_ref, *,
                      in_eps, mxu_bf16):
    """Fully fused diff_pool for one block of TB batch elements.

    x_ref:     (TB, C, N)  raw input points (f32)
    scale_ref: (C, 1)      eval-BN scale = gamma / sqrt(running_var + eps)
    shift_ref: (C, 1)      eval-BN shift = beta - running_mean * scale
    w_ref:     (M, C)      1x1-conv weight
    b_ref:     (M, 1)      1x1-conv bias
    out_ref:   (TB, M, C)  pooled output (transposed layout; wrapper swaps back)
    """
    x = x_ref[...]                                          # (TB, C, N) f32
    tb, _c, _n = x_ref.shape
    m_out, c_in = w_ref.shape

    # InstanceNorm2d(affine=False): per-(batch, channel) stats over the N points
    # (biased variance), with the eval-mode BatchNorm scale folded into the rsqrt.
    mean = jnp.mean(x, axis=2, keepdims=True)               # (TB, C, 1)
    xc = x - mean
    var = jnp.mean(xc * xc, axis=2, keepdims=True)          # (TB, C, 1)
    alpha = scale_ref[...] * jax.lax.rsqrt(var + in_eps)    # (TB, C, 1)
    h = jnp.maximum(xc * alpha + shift_ref[...], 0.0)       # (TB, C, N)

    mxu_dtype = jnp.bfloat16 if mxu_bf16 else jnp.float32

    # 1x1 conv across channels for all TB batches at once (batched MXU matmul):
    #   embed[b] = W @ h[b] + bias                           -> (TB, M, N)
    w_b = jnp.broadcast_to(w_ref[...].astype(mxu_dtype), (tb, m_out, c_in))
    embed = jnp.einsum("bmc,bcn->bmn", w_b, h.astype(mxu_dtype),
                       preferred_element_type=jnp.float32) + b_ref[...]

    # Softmax over the N points (torch dim=2). Reciprocal runs on the EUP slot.
    e = embed - jnp.max(embed, axis=-1, keepdims=True)
    p = jnp.exp(e)
    s = p * pl.reciprocal(jnp.sum(p, axis=-1, keepdims=True), approx=True)

    # Pooling: out[b]^T = S[b] @ x[b]^T (contract over N)     -> (TB, M, C)
    out_t = jnp.einsum("bmn,bcn->bmc", s.astype(mxu_dtype), x.astype(mxu_dtype),
                       preferred_element_type=jnp.float32)
    out_ref[...] = out_t.astype(out_ref.dtype)


def diff_pool_forward(params, x, *, in_eps=IN_EPS, bn_eps=BN_EPS,
                      block_b=None, mxu_bf16=True):
    """diff_pool forward.  x: (B, C, N, 1) NCHW (W == 1).  Returns (B, C, M, 1).

    NOTE: assumes eval-mode BatchNorm2d (running stats folded into an affine) and
    InstanceNorm2d(affine=False), exactly as constructed in the PyTorch module.
    """
    B, C, N, W1 = x.shape
    assert W1 == 1, "diff_pool expects a trailing width-1 dimension (NCHW)."
    xs = x[..., 0].astype(jnp.float32)                       # (B, C, N)

    w = params["w"].astype(jnp.float32)                      # (M, C)
    M = w.shape[0]

    # Fold eval-mode BatchNorm into a per-channel affine on the host side.
    scale = params["gamma"] / jnp.sqrt(params["rv"] + bn_eps)
    shift = params["beta"] - params["rm"] * scale
    scale = scale.reshape(C, 1).astype(jnp.float32)
    shift = shift.reshape(C, 1).astype(jnp.float32)
    bias = params["b"].reshape(M, 1).astype(jnp.float32)

    # --- Batch-block selection -------------------------------------------------
    # Amortize per-grid-step overhead over TB batches, but keep the grid length
    # >= 2 (v7x megacore) and the double-buffered block footprint small relative
    # to every generation's scoped-VMEM budget.
    if block_b is None:
        per_b_bytes = (C * N + M * C) * 4
        cap = max(1, min(64, (8 << 20) // max(per_b_bytes, 1)))
        block_b = min(B, cap)
        if B >= 2:
            block_b = min(block_b, max(1, B // 2))   # >= 2 grid steps when possible
        while B % block_b:                           # block must divide B
            block_b -= 1
    assert B % block_b == 0 and block_b >= 1
    grid = (B // block_b,)

    # --- Compiler hints ----------------------------------------------------------
    x_bytes = B * C * N * 4
    out_bytes = B * M * C * 4
    param_bytes = (2 * C + M * C + M) * 4
    cost = pl.CostEstimate(
        flops=4 * B * M * C * N,                     # conv + pooling matmuls
        transcendentals=B * (M * N + C + M),         # exp + rsqrt + reciprocal
        bytes_accessed=x_bytes + out_bytes + param_bytes,
    )
    block_bytes = block_b * (C * N + M * C) * 4
    vmem_limit = int(min(max(6 * block_bytes, 32 << 20), 64 << 20))

    kernel = functools.partial(_diff_pool_kernel, in_eps=in_eps, mxu_bf16=mxu_bf16)
    out_t = pl.pallas_call(
        kernel,
        out_shape=jax.ShapeDtypeStruct((B, M, C), jnp.float32),
        grid=grid,
        in_specs=[
            pl.BlockSpec((block_b, C, N), lambda i: (i, 0, 0)),
            pl.BlockSpec((C, 1), lambda i: (0, 0)),
            pl.BlockSpec((C, 1), lambda i: (0, 0)),
            pl.BlockSpec((M, C), lambda i: (0, 0)),
            pl.BlockSpec((M, 1), lambda i: (0, 0)),
        ],
        out_specs=pl.BlockSpec((block_b, M, C), lambda i: (i, 0, 0)),
        compiler_params=pltpu.CompilerParams(
            dimension_semantics=("parallel",),       # batch grid -> both TCs on v7x
            vmem_limit_bytes=vmem_limit,
        ),
        cost_estimate=cost,
    )(xs, scale, shift, w, bias)

    # Back to the PyTorch layout (B, C, M, 1); the pooled tensor is tiny.
    return jnp.swapaxes(out_t, 1, 2)[..., None]


def diff_pool_reference(params, x, *, in_eps=IN_EPS, bn_eps=BN_EPS):
    """Pure-JAX reference matching the PyTorch module in eval mode."""
    xs = x[..., 0].astype(jnp.float32)                       # (B, C, N)
    mean = jnp.mean(xs, axis=2, keepdims=True)
    var = jnp.mean((xs - mean) ** 2, axis=2, keepdims=True)
    xn = (xs - mean) / jnp.sqrt(var + in_eps)
    scale = params["gamma"] / jnp.sqrt(params["rv"] + bn_eps)
    shift = params["beta"] - params["rm"] * scale
    h = jnp.maximum(xn * scale[None, :, None] + shift[None, :, None], 0.0)
    embed = jnp.einsum("mc,bcn->bmn", params["w"], h) + params["b"][None, :, None]
    s = jax.nn.softmax(embed, axis=2)
    out = jnp.einsum("bcn,bmn->bcm", xs, s)
    return out[..., None]


if __name__ == "__main__":
    B, C, N, M = 8, 32, 128, 8   # batch, in_channel, points, output_points

    key = jax.random.PRNGKey(0)
    kx, kw, kb, kg, kbt, krm, krv = jax.random.split(key, 7)
    x = jax.random.normal(kx, (B, C, N, 1), jnp.float32)
    params = {
        "w": 0.1 * jax.random.normal(kw, (M, C), jnp.float32),
        "b": 0.1 * jax.random.normal(kb, (M,), jnp.float32),
        # Eval-mode BatchNorm parameters (non-trivial so the folded affine path is
        # actually exercised; right after __init__ these would be 1/0/0/1).
        "gamma": 1.0 + 0.1 * jax.random.normal(kg, (C,), jnp.float32),
        "beta": 0.1 * jax.random.normal(kbt, (C,), jnp.float32),
        "rm": 0.1 * jax.random.normal(krm, (C,), jnp.float32),
        "rv": 1.0 + 0.5 * jax.random.uniform(krv, (C,), jnp.float32),
    }

    ref = diff_pool_reference(params, x)

    # Default (bf16 MXU operands) path.
    out = jax.jit(diff_pool_forward)(params, x)
    out = jax.block_until_ready(out)
    assert out.shape == (B, C, M, 1), out.shape
    assert bool(jnp.all(jnp.isfinite(out)))
    err_bf16 = float(jnp.max(jnp.abs(out - ref)))
    assert jnp.allclose(out, ref, rtol=2e-2, atol=2e-2), f"bf16 max abs err {err_bf16}"

    # Exact-f32 MXU path (tighter tolerance).
    out_f32 = jax.jit(functools.partial(diff_pool_forward, mxu_bf16=False))(params, x)
    out_f32 = jax.block_until_ready(out_f32)
    err_f32 = float(jnp.max(jnp.abs(out_f32 - ref)))
    assert jnp.allclose(out_f32, ref, rtol=2e-3, atol=2e-3), f"f32 max abs err {err_f32}"

    print("KERNEL_OK")
</pallas_src>

<mosaic_0001>
module attributes {stable_mosaic.version = 11 : i64} {
  func.func @_diff_pool_kernel(%arg0: i32, %arg1: memref<4x32x128xf32, #tpu.memory_space<vmem>>, %arg2: memref<32x1xf32, #tpu.memory_space<vmem>>, %arg3: memref<32x1xf32, #tpu.memory_space<vmem>>, %arg4: memref<8x32xf32, #tpu.memory_space<vmem>>, %arg5: memref<8x1xf32, #tpu.memory_space<vmem>>, %arg6: memref<4x8x32xf32, #tpu.memory_space<vmem>>) attributes {dimension_semantics = [#tpu.dimension_semantics<parallel>], iteration_bounds = array<i64: 2>, scalar_prefetch = 0 : i64, scratch_operands = 0 : i64, tpu.core_type = #tpu.core_type<tc>, window_params = [{transform_indices = @transform_0, window_bounds = array<i64: 4, 32, 128>}, {pipeline_mode = #tpu.pipeline_mode<synchronous>, transform_indices = @transform_1, window_bounds = array<i64: 32, 1>}, {pipeline_mode = #tpu.pipeline_mode<synchronous>, transform_indices = @transform_2, window_bounds = array<i64: 32, 1>}, {pipeline_mode = #tpu.pipeline_mode<synchronous>, transform_indices = @transform_3, window_bounds = array<i64: 8, 32>}, {pipeline_mode = #tpu.pipeline_mode<synchronous>, transform_indices = @transform_4, window_bounds = array<i64: 8, 1>}, {transform_indices = @transform_5, window_bounds = array<i64: 4, 8, 32>}]} {
    %c0 = arith.constant 0 : index
    %c0_0 = arith.constant 0 : index
    %c0_1 = arith.constant 0 : index
    %0 = vector.load %arg1[%c0, %c0_0, %c0_1] : memref<4x32x128xf32, #tpu.memory_space<vmem>>, vector<4x32x128xf32>
    %cst = arith.constant dense<0.000000e+00> : vector<4x32xf32>
    %1 = vector.multi_reduction <add>, %0, %cst [2] : vector<4x32x128xf32> to vector<4x32xf32>
    %2 = vector.shape_cast %1 : vector<4x32xf32> to vector<4x32x1xf32>
    %cst_2 = arith.constant 1.280000e+02 : f32
    %3 = vector.broadcast %cst_2 : f32 to vector<4x32x1xf32>
    %4 = arith.divf %2, %3 : vector<4x32x1xf32>
    %5 = vector.broadcast %4 : vector<4x32x1xf32> to vector<4x32x128xf32>
    %6 = arith.subf %0, %5 : vector<4x32x128xf32>
    %7 = arith.mulf %6, %6 : vector<4x32x128xf32>
    %cst_3 = arith.constant dense<0.000000e+00> : vector<4x32xf32>
    %8 = vector.multi_reduction <add>, %7, %cst_3 [2] : vector<4x32x128xf32> to vector<4x32xf32>
    %9 = vector.shape_cast %8 : vector<4x32xf32> to vector<4x32x1xf32>
    %cst_4 = arith.constant 1.280000e+02 : f32
    %10 = vector.broadcast %cst_4 : f32 to vector<4x32x1xf32>
    %11 = arith.divf %9, %10 : vector<4x32x1xf32>
    %c0_5 = arith.constant 0 : index
    %c0_6 = arith.constant 0 : index
    %12 = vector.load %arg2[%c0_5, %c0_6] : memref<32x1xf32, #tpu.memory_space<vmem>>, vector<32x1xf32>
    %cst_7 = arith.constant 1.000000e-03 : f32
    %13 = vector.broadcast %cst_7 : f32 to vector<4x32x1xf32>
    %14 = arith.addf %11, %13 : vector<4x32x1xf32>
    %15 = math.rsqrt %14 : vector<4x32x1xf32>
    %16 = vector.shape_cast %12 : vector<32x1xf32> to vector<1x32x1xf32>
    %17 = vector.broadcast %16 : vector<1x32x1xf32> to vector<4x32x1xf32>
    %18 = arith.mulf %17, %15 : vector<4x32x1xf32>
    %19 = vector.broadcast %18 : vector<4x32x1xf32> to vector<4x32x128xf32>
    %20 = arith.mulf %6, %19 : vector<4x32x128xf32>
    %c0_8 = arith.constant 0 : index
    %c0_9 = arith.constant 0 : index
    %21 = vector.load %arg3[%c0_8, %c0_9] : memref<32x1xf32, #tpu.memory_space<vmem>>, vector<32x1xf32>
    %22 = vector.shape_cast %21 : vector<32x1xf32> to vector<1x32x1xf32>
    %23 = vector.broadcast %22 : vector<1x32x1xf32> to vector<4x32x128xf32>
    %24 = arith.addf %20, %23 : vector<4x32x128xf32>
    %cst_10 = arith.constant 0.000000e+00 : f32
    %25 = vector.broadcast %cst_10 : f32 to vector<4x32x128xf32>
    %26 = arith.maximumf %24, %25 : vector<4x32x128xf32>
    %c0_11 = arith.constant 0 : index
    %c0_12 = arith.constant 0 : index
    %27 = vector.load %arg4[%c0_11, %c0_12] : memref<8x32xf32, #tpu.memory_space<vmem>>, vector<8x32xf32>
    %28 = arith.truncf %27 : vector<8x32xf32> to vector<8x32xbf16>
    %29 = vector.shape_cast %28 : vector<8x32xbf16> to vector<1x8x32xbf16>
    %30 = vector.broadcast %29 : vector<1x8x32xbf16> to vector<4x8x32xbf16>
    %31 = arith.truncf %26 : vector<4x32x128xf32> to vector<4x32x128xbf16>
    "tpu.trace_start"() <{level = 10 : i32, message = "bmc,bcn->bmn"}> : () -> ()
    %cst_13 = arith.constant dense<0.000000e+00> : vector<4x8x128xf32>
    %32 = tpu.matmul %30, %31, %cst_13 {dimension_numbers = #tpu.dot_dimension_numbers<[2], [1], [1], [2], [0, 0, 0, 1, 1, 2], [0], [0]>} : vector<4x8x32xbf16>, vector<4x32x128xbf16>, vector<4x8x128xf32> -> vector<4x8x128xf32>
    "tpu.trace_stop"() : () -> ()
    %c0_14 = arith.constant 0 : index
    %c0_15 = arith.constant 0 : index
    %33 = vector.load %arg5[%c0_14, %c0_15] : memref<8x1xf32, #tpu.memory_space<vmem>>, vector<8x1xf32>
    %34 = vector.shape_cast %33 : vector<8x1xf32> to vector<1x8x1xf32>
    %35 = vector.broadcast %34 : vector<1x8x1xf32> to vector<4x8x128xf32>
    %36 = arith.addf %32, %35 : vector<4x8x128xf32>
    %cst_16 = arith.constant dense<0xFF800000> : vector<4x8xf32>
    %37 = vector.multi_reduction <maximumf>, %36, %cst_16 [2] : vector<4x8x128xf32> to vector<4x8xf32>
    %38 = vector.shape_cast %37 : vector<4x8xf32> to vector<4x8x1xf32>
    %39 = vector.broadcast %38 : vector<4x8x1xf32> to vector<4x8x128xf32>
    %40 = arith.subf %36, %39 : vector<4x8x128xf32>
    %41 = math.exp %40 : vector<4x8x128xf32>
    %cst_17 = arith.constant dense<0.000000e+00> : vector<4x8xf32>
    %42 = vector.multi_reduction <add>, %41, %cst_17 [2] : vector<4x8x128xf32> to vector<4x8xf32>
    %43 = vector.shape_cast %42 : vector<4x8xf32> to vector<4x8x1xf32>
    %44 = tpu.reciprocal %43 {approx = true} : vector<4x8x1xf32> -> vector<4x8x1xf32>
    %45 = vector.broadcast %44 : vector<4x8x1xf32> to vector<4x8x128xf32>
    %46 = arith.mulf %41, %45 : vector<4x8x128xf32>
    %47 = arith.truncf %46 : vector<4x8x128xf32> to vector<4x8x128xbf16>
    %48 = arith.truncf %0 : vector<4x32x128xf32> to vector<4x32x128xbf16>
    "tpu.trace_start"() <{level = 10 : i32, message = "bmn,bcn->bmc"}> : () -> ()
    %cst_18 = arith.constant dense<0.000000e+00> : vector<4x8x32xf32>
    %49 = tpu.matmul %47, %48, %cst_18 {dimension_numbers = #tpu.dot_dimension_numbers<[2], [2], [1], [1], [0, 0, 0, 1, 1, 1], [0], [0]>} : vector<4x8x128xbf16>, vector<4x32x128xbf16>, vector<4x8x32xf32> -> vector<4x8x32xf32>
    "tpu.trace_stop"() : () -> ()
    %c0_19 = arith.constant 0 : index
    %c0_20 = arith.constant 0 : index
    %c0_21 = arith.constant 0 : index
    %50 = vector.load %arg6[%c0_19, %c0_20, %c0_21] : memref<4x8x32xf32, #tpu.memory_space<vmem>>, vector<4x8x32xf32>
    tpu.vector_store %arg6[%c0_19, %c0_20, %c0_21], %49 {strides = array<i32>} : memref<4x8x32xf32, #tpu.memory_space<vmem>>, vector<4x8x32xf32>,
    return
  }
  func.func @transform_0(%arg0: i32) -> (i32, i32, i32) {
    %c0_i32 = arith.constant 0 : i32
    %c0_i32_0 = arith.constant 0 : i32
    %c0_i32_1 = arith.constant 0 : i32
    return %arg0, %c0_i32, %c0_i32_0 : i32, i32, i32
  }
  func.func @transform_1(%arg0: i32) -> (i32, i32) {
    %c0_i32 = arith.constant 0 : i32
    %c0_i32_0 = arith.constant 0 : i32
    %c0_i32_1 = arith.constant 0 : i32
    return %c0_i32, %c0_i32_0 : i32, i32
  }
  func.func @transform_2(%arg0: i32) -> (i32, i32) {
    %c0_i32 = arith.constant 0 : i32
    %c0_i32_0 = arith.constant 0 : i32
    %c0_i32_1 = arith.constant 0 : i32
    return %c0_i32, %c0_i32_0 : i32, i32
  }
  func.func @transform_3(%arg0: i32) -> (i32, i32) {
    %c0_i32 = arith.constant 0 : i32
    %c0_i32_0 = arith.constant 0 : i32
    %c0_i32_1 = arith.constant 0 : i32
    return %c0_i32, %c0_i32_0 : i32, i32
  }
  func.func @transform_4(%arg0: i32) -> (i32, i32) {
    %c0_i32 = arith.constant 0 : i32
    %c0_i32_0 = arith.constant 0 : i32
    %c0_i32_1 = arith.constant 0 : i32
    return %c0_i32, %c0_i32_0 : i32, i32
  }
  func.func @transform_5(%arg0: i32) -> (i32, i32, i32) {
    %c0_i32 = arith.constant 0 : i32
    %c0_i32_0 = arith.constant 0 : i32
    %c0_i32_1 = arith.constant 0 : i32
    return %arg0, %c0_i32, %c0_i32_0 : i32, i32, i32
  }
}

</mosaic_0001>

<llo_original>
// kernel: diff_pool_forward.1
$region0: #{diff_pool_forward.1}
  #allocation0 [shape = 'u32[]', space=smem, size = 0x4, offset = 0x4, fixed_abs, tag = 'smem constant byte address 0x4 - core index']
  #allocation1 [shape = 'u32[144,128]{1,0:T(1,128)}', space=vmem, size = 0x12000, scoped, tag = 'internal scratch']
  %s0 = inlined_call_operand.hbm [shape: f32[8,32,128], index: 0, kind: input, shape index: {}]
  %s1 = inlined_call_operand.vmem [shape: f32[32,1], index: 1, kind: input, shape index: {}]
  %s2 = inlined_call_operand.vmem [shape: f32[32,1], index: 2, kind: input, shape index: {}]
  %s3 = inlined_call_operand.vmem [shape: f32[8,32], index: 3, kind: input, shape index: {}]
  %s4 = inlined_call_operand.vmem [shape: f32[8,1], index: 4, kind: input, shape index: {}]
  %s5 = inlined_call_operand.hbm [shape: f32[8,8,32], index: 5, kind: output, shape index: {}]
  %s6 = sld [smem:[#allocation0]]
  $region57: #{diff_pool_forward.1} parent=0
    _
  %s8 = ssub.s32 1, %s6
  %s9 = scalar_select 0, %s8, %s6
  $region1: #{diff_pool_forward.1} parent=0
    #allocation2 [shape = 'u8[131072]{0}', space=vmem, size = 0x20000, scoped, tag = 'input window, operand 0']
    #allocation3 [shape = 's32[2]{0}', space=sflag, size = 0x8, scoped, tag = 'scoped memory for diff_pool_forward.1']
    #allocation4 [shape = 's32[2]{0}', space=sflag, size = 0x8, scoped, tag = 'scoped memory for diff_pool_forward.1']
    #allocation5 [shape = 'u8[32768]{0}', space=vmem, size = 0x8000, scoped, tag = 'output window, operand 0']
    %10 = vsyncpa [#allocation3], 0
    %s11 = scalar_lea.sflag [#allocation3], 1
    %12 = vsyncpa %s11, 0
    %13 = vsyncpa [#allocation4], 0
    %s14 = scalar_lea.sflag [#allocation4], 1
    %15 = vsyncpa %s14, 0
    loop: start=0, step=1, limit=4
    $region2: #{diff_pool_forward.1} parent=1 // loop_pre_header
      _
    $region3: #{diff_pool_forward.1} parent=1 // loop_header
      %s17 = sphi 0, %s21
      %p18 = scmp.ge.s32.totalorder %s17, 4
      %s27 = sphi 0, %s29
      %s30 = sphi 0, %s27
      %s31 = sphi 0, %s30
      %s47 = sphi 0, %s31
      %s51 = sphi 0, %s51
      %s53 = sphi 0, %s51
      %s54 = sphi 0, %s53
      %s68 = sphi 0, %s54
      %s72 = sphi 0, %s72
      %s74 = sphi 0, %s72
      %s75 = sphi 0, %s74
      %s89 = sphi 0, %s75
      %s93 = sphi 0, %s93
      %s95 = sphi 0, %s93
      %s96 = sphi 0, %s95
      %s110 = sphi 0, %s96
      %s114 = sphi 0, %s114
      %s116 = sphi 0, %s114
      %s117 = sphi 0, %s116
      %s131 = sphi 0, %s117
      %s137 = sphi 0, %s139
      %s140 = sphi 0, %s137
      %s141 = sphi 0, %s140
      %s157 = sphi 0, %s141
    $region4: #{diff_pool_forward.1} parent=1 // loop_header_branch
      %20 = sbr.rel (%p18) target = $region8
    $region5: #{diff_pool_forward.1} parent=1 // loop_body
      %s22 = ssub.s32 %s17, 1
      %s23 = ssub.s32 %s17, 2
      %s24 = sadd.s32 %s17, 1
      %s25 = ssub.s32 %s17, %s24
      %p26 = scmp.eq.s32.totalorder %s25, 0
      %s28 = sadd.s32 %s27, 1
      %s29 = scalar_select %p26, %s27, %s28
      %p32 = pneg %p26
      %p33 = scmp.eq.s32.totalorder %s17, 1
      %p34 = por %p32, %p33
      %p35 = scmp.ne.s32.totalorder %s27, %s30
      %p36 = scmp.eq.s32.totalorder %s17, 0
      %p37 = por %p35, %p36
      %p38 = scmp.ne.s32.totalorder %s27, %s30
      %p39 = scmp.eq.s32.totalorder %s22, 1
      %p40 = por %p38, %p39
      %p41 = scmp.ne.s32.totalorder %s30, %s31
      %p42 = scmp.eq.s32.totalorder %s22, 0
      %p43 = por %p41, %p42
      %p44 = scmp.ne.s32.totalorder %s30, %s31
      %p45 = scmp.eq.s32.totalorder %s23, 1
      %p46 = por %p44, %p45
      %p48 = scmp.ne.s32.totalorder %s31, %s47
      %p49 = scmp.eq.s32.totalorder %s23, 0
      %p50 = por %p48, %p49
      %s52 = sadd.s32 %s51, 1
      %p55 = scmp.eq.s32.totalorder %s17, 1
      %p56 = scmp.ne.s32.totalorder %s51, %s53
      %p57 = scmp.eq.s32.totalorder %s17, 0
      %p58 = por %p56, %p57
      %p59 = scmp.ne.s32.totalorder %s51, %s53
      %p60 = scmp.eq.s32.totalorder %s22, 1
      %p61 = por %p59, %p60
      %p62 = scmp.ne.s32.totalorder %s53, %s54
      %p63 = scmp.eq.s32.totalorder %s22, 0
      %p64 = por %p62, %p63
      %p65 = scmp.ne.s32.totalorder %s53, %s54
      %p66 = scmp.eq.s32.totalorder %s23, 1
      %p67 = por %p65, %p66
      %p69 = scmp.ne.s32.totalorder %s54, %s68
      %p70 = scmp.eq.s32.totalorder %s23, 0
      %p71 = por %p69, %p70
      %s73 = sadd.s32 %s72, 1
      %p76 = scmp.eq.s32.totalorder %s17, 1
      %p77 = scmp.ne.s32.totalorder %s72, %s74
      %p78 = scmp.eq.s32.totalorder %s17, 0
      %p79 = por %p77, %p78
      %p80 = scmp.ne.s32.totalorder %s72, %s74
      %p81 = scmp.eq.s32.totalorder %s22, 1
      %p82 = por %p80, %p81
      %p83 = scmp.ne.s32.totalorder %s74, %s75
      %p84 = scmp.eq.s32.totalorder %s22, 0
      %p85 = por %p83, %p84
      %p86 = scmp.ne.s32.totalorder %s74, %s75
      %p87 = scmp.eq.s32.totalorder %s23, 1
      %p88 = por %p86, %p87
      %p90 = scmp.ne.s32.totalorder %s75, %s89
      %p91 = scmp.eq.s32.totalorder %s23, 0
      %p92 = por %p90, %p91
      %s94 = sadd.s32 %s93, 1
      %p97 = scmp.eq.s32.totalorder %s17, 1
      %p98 = scmp.ne.s32.totalorder %s93, %s95
      %p99 = scmp.eq.s32.totalorder %s17, 0
      %p100 = por %p98, %p99
      %p101 = scmp.ne.s32.totalorder %s93, %s95
      %p102 = scmp.eq.s32.totalorder %s22, 1
      %p103 = por %p101, %p102
      %p104 = scmp.ne.s32.totalorder %s95, %s96
      %p105 = scmp.eq.s32.totalorder %s22, 0
      %p106 = por %p104, %p105
      %p107 = scmp.ne.s32.totalorder %s95, %s96
      %p108 = scmp.eq.s32.totalorder %s23, 1
      %p109 = por %p107, %p108
      %p111 = scmp.ne.s32.totalorder %s96, %s110
      %p112 = scmp.eq.s32.totalorder %s23, 0
      %p113 = por %p111, %p112
      %s115 = sadd.s32 %s114, 1
      %p118 = scmp.eq.s32.totalorder %s17, 1
      %p119 = scmp.ne.s32.totalorder %s114, %s116
      %p120 = scmp.eq.s32.totalorder %s17, 0
      %p121 = por %p119, %p120
      %p122 = scmp.ne.s32.totalorder %s114, %s116
      %p123 = scmp.eq.s32.totalorder %s22, 1
      %p124 = por %p122, %p123
      %p125 = scmp.ne.s32.totalorder %s116, %s117
      %p126 = scmp.eq.s32.totalorder %s22, 0
      %p127 = por %p125, %p126
      %p128 = scmp.ne.s32.totalorder %s116, %s117
      %p129 = scmp.eq.s32.totalorder %s23, 1
      %p130 = por %p128, %p129
      %p132 = scmp.ne.s32.totalorder %s117, %s131
      %p133 = scmp.eq.s32.totalorder %s23, 0
      %p134 = por %p132, %p133
      %s135 = ssub.s32 %s17, %s24
      %p136 = scmp.eq.s32.totalorder %s135, 0
      %s138 = sadd.s32 %s137, 1
      %s139 = scalar_select %p136, %s137, %s138
      %p142 = pneg %p136
      %p143 = scmp.eq.s32.totalorder %s17, 1
      %p144 = por %p142, %p143
      %p145 = scmp.ne.s32.totalorder %s137, %s140
      %p146 = scmp.eq.s32.totalorder %s17, 0
      %p147 = por %p145, %p146
      %p148 = scmp.ne.s32.totalorder %s137, %s140
      %p149 = scmp.eq.s32.totalorder %s22, 1
      %p150 = por %p148, %p149
      %p151 = scmp.ne.s32.totalorder %s140, %s141
      %p152 = scmp.eq.s32.totalorder %s22, 0
      %p153 = por %p151, %p152
      %p154 = scmp.ne.s32.totalorder %s140, %s141
      %p155 = scmp.eq.s32.totalorder %s23, 1
      %p156 = por %p154, %p155
      %p158 = scmp.ne.s32.totalorder %s141, %s157
      %p159 = scmp.eq.s32.totalorder %s23, 0
      %p160 = por %p158, %p159
      %p161 = scmp.le.s32.totalorder 1, %s17
      %p162 = scmp.lt.s32.totalorder %s17, 3
      %p163 = pnand %p161, %p162
      %p164 = pneg %p163
      // Predicated region
      $region9: #{diff_pool_forward.1} parent=5 // pred_check
        _
      $region10: #{diff_pool_forward.1} parent=5 // pred_check_branch
        %166 = sbr.rel (%p163) target = $region12
      $region11: #{diff_pool_forward.1} parent=5 // pred_region
        %s167 = ssub.s32 %s17, 1
        // Predicated region
        $region13: #{diff_pool_forward.1} parent=11 // pred_check
          %p168 = pneg %p64
        $region14: #{diff_pool_forward.1} parent=11 // pred_check_branch
          %170 = sbr.rel (%p168) target = $region16
        $region15: #{diff_pool_forward.1} parent=11 // pred_region
          _
        $region16: #{diff_pool_forward.1} parent=11 // pred_fallthru
          _
        // Predicated region
        $region17: #{diff_pool_forward.1} parent=11 // pred_check
          %p171 = pneg %p85
        $region18: #{diff_pool_forward.1} parent=11 // pred_check_branch
          %173 = sbr.rel (%p171) target = $region20
        $region19: #{diff_pool_forward.1} parent=11 // pred_region
          _
        $region20: #{diff_pool_forward.1} parent=11 // pred_fallthru
          _
        // Predicated region
        $region21: #{diff_pool_forward.1} parent=11 // pred_check
          %p174 = pneg %p106
        $region22: #{diff_pool_forward.1} parent=11 // pred_check_branch
          %176 = sbr.rel (%p174) target = $region24
        $region23: #{diff_pool_forward.1} parent=11 // pred_region
          _
        $region24: #{diff_pool_forward.1} parent=11 // pred_fallthru
          _
        // Predicated region
        $region25: #{diff_pool_forward.1} parent=11 // pred_check
          %p177 = pneg %p127
        $region26: #{diff_pool_forward.1} parent=11 // pred_check_branch
          %179 = sbr.rel (%p177) target = $region28
        $region27: #{diff_pool_forward.1} parent=11 // pred_region
          _
        $region28: #{diff_pool_forward.1} parent=11 // pred_fallthru
          _
      $region12: #{diff_pool_forward.1} parent=5 // pred_fallthru
        _
      %p180 = scmp.lt.s32.totalorder %s17, 2
      // Predicated region
      $region29: #{diff_pool_forward.1} parent=5 // pred_check
        %p181 = pneg %p180
      $region30: #{diff_pool_forward.1} parent=5 // pred_check_branch
        %183 = sbr.rel (%p181) target = $region32
      $region31: #{diff_pool_forward.1} parent=5 // pred_region
        // Predicated region
        $region33: #{diff_pool_forward.1} parent=31 // pred_check
          %p184 = pneg %p37
        $region34: #{diff_pool_forward.1} parent=31 // pred_check_branch
          %186 = sbr.rel (%p184) target = $region36
        $region35: #{diff_pool_forward.1} parent=31 // pred_region
          %s187 = sand.u32 %s27, 1
          %s188 = scalar_lea.sflag [#allocation3], %s187
          %s189 = sand.u32 %s27, 1
          %s190 = smul.addr %s189, 128
          %s191 = scalar_lea.vmem [#allocation2], %s190
          %s192 = smul.u32 4, %s17
          %s194 = ssub.s32 2048, 2048
          %195 = vsyncadd %s188, %s194
          %s196 = smul.addr %s192, 4
          %s197 = smul.addr %s196, 128
          %s198 = scalar_lea.hbm %s0, %s197
          %s199 = sshll.u32 %s191, 4
          %s200 = int_to_ptr.vmem [resolvable:$true] %s199
          %205 = dma.hbm_to_vmem [thread:$0]  %s198, 2048, %s200, %s188, 128, 128, 8
        $region36: #{diff_pool_forward.1} parent=31 // pred_fallthru
          _
      $region32: #{diff_pool_forward.1} parent=5 // pred_fallthru
        _
      %p206 = scmp.le.s32.totalorder 1, %s17
      %p207 = scmp.lt.s32.totalorder %s17, 3
      %p208 = pnand %p206, %p207
      %p209 = pneg %p208
      // Predicated region
      $region37: #{diff_pool_forward.1} parent=5 // pred_check
        _
      $region38: #{diff_pool_forward.1} parent=5 // pred_check_branch
        %211 = sbr.rel (%p208) target = $region40
      $region39: #{diff_pool_forward.1} parent=5 // pred_region
        %s212 = ssub.s32 %s17, 1
        %s213 = sand.u32 %s30, 1
        %s214 = scalar_lea.sflag [#allocation3], %s213
        %s215 = sand.u32 %s30, 1
        %s216 = smul.addr %s215, 128
        %s217 = scalar_lea.vmem [#allocation2], %s216
        // Predicated region
        $region41: #{diff_pool_forward.1} parent=39 // pred_check
          %p218 = pneg %p43
        $region42: #{diff_pool_forward.1} parent=39 // pred_check_branch
          %220 = sbr.rel (%p218) target = $region44
        $region43: #{diff_pool_forward.1} parent=39 // pred_region
          %221 = dma.done %s214, 2048
        $region44: #{diff_pool_forward.1} parent=39 // pred_fallthru
          _
        %s222 = sand.u32 %s30, 1
        %s223 = scalar_lea.sflag [#allocation3], %s222
        %s224 = sand.u32 %s30, 1
        %s225 = smul.addr %s224, 128
        %s226 = scalar_lea.vmem [#allocation2], %s225
        %p227 = pneg %p43
        %p228 = pneg %p40
        %p229 = pneg %p64
        %p230 = pneg %p61
        %p231 = pneg %p85
        %p232 = pneg %p82
        %p233 = pneg %p106
        %p234 = pneg %p103
        %p235 = pneg %p127
        %p236 = pneg %p124
        %p237 = pneg %p153
        %p238 = pneg %p150
        %s239 = sand.u32 %s140, 1
        %s240 = scalar_lea.sflag [#allocation4], %s239
        %s241 = sand.u32 %s140, 1
        %s242 = smul.addr %s241, 32
        %s243 = scalar_lea.vmem [#allocation5], %s242
        %s244 = smul.u32 4, %s22
        %s245 = smul.u32 4, %s22
        %v247 = vld [vmem:[%s217] sm:$0xff]
        %v248 = vld [vmem:[%s217 + $0x8] sm:$0xff]
        %v249 = vld [vmem:[%s217 + $0x10] sm:$0xff]
        %v250 = vld [vmem:[%s217 + $0x18] sm:$0xff]
        %v251 = vld [vmem:[%s217 + $0x20] sm:$0xff]
        %v252 = vld [vmem:[%s217 + $0x28] sm:$0xff]
        %v253 = vld [vmem:[%s217 + $0x30] sm:$0xff]
        %v254 = vld [vmem:[%s217 + $0x38] sm:$0xff]
        %v255 = vld [vmem:[%s217 + $0x40] sm:$0xff]
        %v256 = vld [vmem:[%s217 + $0x48] sm:$0xff]
        %v257 = vld [vmem:[%s217 + $0x50] sm:$0xff]
        %v258 = vld [vmem:[%s217 + $0x58] sm:$0xff]
        %v259 = vld [vmem:[%s217 + $0x60] sm:$0xff]
        %v260 = vld [vmem:[%s217 + $0x68] sm:$0xff]
        %v261 = vld [vmem:[%s217 + $0x70] sm:$0xff]
        %v262 = vld [vmem:[%s217 + $0x78] sm:$0xff]
        %263 = vadd.xlane.f32.xlu0 %v247
        %v264 = vpop.xlane.xlu0 %263
        %265 = vadd.xlane.f32.xlu0 %v248
        %v266 = vpop.xlane.xlu0 %265
        %267 = vadd.xlane.f32.xlu0 %v249
        %v268 = vpop.xlane.xlu0 %267
        %269 = vadd.xlane.f32.xlu0 %v250
        %v270 = vpop.xlane.xlu0 %269
        %271 = vadd.xlane.f32.xlu0 %v251
        %v272 = vpop.xlane.xlu0 %271
        %273 = vadd.xlane.f32.xlu0 %v252
        %v274 = vpop.xlane.xlu0 %273
        %275 = vadd.xlane.f32.xlu0 %v253
        %v276 = vpop.xlane.xlu0 %275
        %277 = vadd.xlane.f32.xlu0 %v254
        %v278 = vpop.xlane.xlu0 %277
        %279 = vadd.xlane.f32.xlu0 %v255
        %v280 = vpop.xlane.xlu0 %279
        %281 = vadd.xlane.f32.xlu0 %v256
        %v282 = vpop.xlane.xlu0 %281
        %283 = vadd.xlane.f32.xlu0 %v257
        %v284 = vpop.xlane.xlu0 %283
        %285 = vadd.xlane.f32.xlu0 %v258
        %v286 = vpop.xlane.xlu0 %285
        %287 = vadd.xlane.f32.xlu0 %v259
        %v288 = vpop.xlane.xlu0 %287
        %289 = vadd.xlane.f32.xlu0 %v260
        %v290 = vpop.xlane.xlu0 %289
        %291 = vadd.xlane.f32.xlu0 %v261
        %v292 = vpop.xlane.xlu0 %291
        %293 = vadd.xlane.f32.xlu0 %v262
        %v294 = vpop.xlane.xlu0 %293
        %v295 = vrcp.pop 128.0
        %v296 = vmul.f32 %v264, %v295
        %v297 = vmul.f32 %v266, %v295
        %v298 = vmul.f32 %v268, %v295
        %v299 = vmul.f32 %v270, %v295
        %v300 = vmul.f32 %v272, %v295
        %v301 = vmul.f32 %v274, %v295
        %v302 = vmul.f32 %v276, %v295
        %v303 = vmul.f32 %v278, %v295
        %v304 = vmul.f32 %v280, %v295
        %v305 = vmul.f32 %v282, %v295
        %v306 = vmul.f32 %v284, %v295
        %v307 = vmul.f32 %v286, %v295
        %v308 = vmul.f32 %v288, %v295
        %v309 = vmul.f32 %v290, %v295
        %v310 = vmul.f32 %v292, %v295
        %v311 = vmul.f32 %v294, %v295
        %v312 = vsub.f32 %v247, %v296
        %v313 = vsub.f32 %v248, %v297
        %v314 = vsub.f32 %v249, %v298
        %v315 = vsub.f32 %v250, %v299
        %v316 = vsub.f32 %v251, %v300
        %v317 = vsub.f32 %v252, %v301
        %v318 = vsub.f32 %v253, %v302
        %v319 = vsub.f32 %v254, %v303
        %v320 = vsub.f32 %v255, %v304
        %v321 = vsub.f32 %v256, %v305
        %v322 = vsub.f32 %v257, %v306
        %v323 = vsub.f32 %v258, %v307
        %v324 = vsub.f32 %v259, %v308
        %v325 = vsub.f32 %v260, %v309
        %v326 = vsub.f32 %v261, %v310
        %v327 = vsub.f32 %v262, %v311
        %v328 = vmul.f32 %v312, %v312
        %v329 = vmul.f32 %v313, %v313
        %v330 = vmul.f32 %v314, %v314
        %v331 = vmul.f32 %v315, %v315
        %v332 = vmul.f32 %v316, %v316
        %v333 = vmul.f32 %v317, %v317
        %v334 = vmul.f32 %v318, %v318
        %v335 = vmul.f32 %v319, %v319
        %v336 = vmul.f32 %v320, %v320
        %v337 = vmul.f32 %v321, %v321
        %v338 = vmul.f32 %v322, %v322
        %v339 = vmul.f32 %v323, %v323
        %v340 = vmul.f32 %v324, %v324
        %v341 = vmul.f32 %v325, %v325
        %v342 = vmul.f32 %v326, %v326
        %v343 = vmul.f32 %v327, %v327
        %344 = vadd.xlane.f32.xlu0 %v328
        %v345 = vpop.xlane.xlu0 %344
        %346 = vadd.xlane.f32.xlu0 %v329
        %v347 = vpop.xlane.xlu0 %346
        %348 = vadd.xlane.f32.xlu0 %v330
        %v349 = vpop.xlane.xlu0 %348
        %350 = vadd.xlane.f32.xlu0 %v331
        %v351 = vpop.xlane.xlu0 %350
        %352 = vadd.xlane.f32.xlu0 %v332
        %v353 = vpop.xlane.xlu0 %352
        %354 = vadd.xlane.f32.xlu0 %v333
        %v355 = vpop.xlane.xlu0 %354
        %356 = vadd.xlane.f32.xlu0 %v334
        %v357 = vpop.xlane.xlu0 %356
        %358 = vadd.xlane.f32.xlu0 %v335
        %v359 = vpop.xlane.xlu0 %358
        %360 = vadd.xlane.f32.xlu0 %v336
        %v361 = vpop.xlane.xlu0 %360
        %362 = vadd.xlane.f32.xlu0 %v337
        %v363 = vpop.xlane.xlu0 %362
        %364 = vadd.xlane.f32.xlu0 %v338
        %v365 = vpop.xlane.xlu0 %364
        %366 = vadd.xlane.f32.xlu0 %v339
        %v367 = vpop.xlane.xlu0 %366
        %368 = vadd.xlane.f32.xlu0 %v340
        %v369 = vpop.xlane.xlu0 %368
        %370 = vadd.xlane.f32.xlu0 %v341
        %v371 = vpop.xlane.xlu0 %370
        %372 = vadd.xlane.f32.xlu0 %v342
        %v373 = vpop.xlane.xlu0 %372
        %374 = vadd.xlane.f32.xlu0 %v343
        %v375 = vpop.xlane.xlu0 %374
        %v376 = vmul.f32 %v345, %v295
        %v377 = vmul.f32 %v347, %v295
        %v378 = vmul.f32 %v349, %v295
        %v379 = vmul.f32 %v351, %v295
        %v380 = vmul.f32 %v353, %v295
        %v381 = vmul.f32 %v355, %v295
        %v382 = vmul.f32 %v357, %v295
        %v383 = vmul.f32 %v359, %v295
        %v384 = vmul.f32 %v361, %v295
        %v385 = vmul.f32 %v363, %v295
        %v386 = vmul.f32 %v365, %v295
        %v387 = vmul.f32 %v367, %v295
        %v388 = vmul.f32 %v369, %v295
        %v389 = vmul.f32 %v371, %v295
        %v390 = vmul.f32 %v373, %v295
        %v391 = vmul.f32 %v375, %v295
        %v392 = vld [vmem:[%s1] sm:$0xff]
        %v393 = vld [vmem:[%s1 + $0x8] sm:$0xff]
        %v394 = vld [vmem:[%s1 + $0x10] sm:$0xff]
        %v395 = vld [vmem:[%s1 + $0x18] sm:$0xff]
        %v396 = vadd.f32 %v376, 0.001
        %v397 = vadd.f32 %v377, 0.001
        %v398 = vadd.f32 %v378, 0.001
        %v399 = vadd.f32 %v379, 0.001
        %v400 = vadd.f32 %v380, 0.001
        %v401 = vadd.f32 %v381, 0.001
        %v402 = vadd.f32 %v382, 0.001
        %v403 = vadd.f32 %v383, 0.001
        %v404 = vadd.f32 %v384, 0.001
        %v405 = vadd.f32 %v385, 0.001
        %v406 = vadd.f32 %v386, 0.001
        %v407 = vadd.f32 %v387, 0.001
        %v408 = vadd.f32 %v388, 0.001
        %v409 = vadd.f32 %v389, 0.001
        %v410 = vadd.f32 %v390, 0.001
        %v411 = vadd.f32 %v391, 0.001
        %v412 = vrsqrt.pop %v396
        %v413 = vrsqrt.pop %v397
        %v414 = vrsqrt.pop %v398
        %v415 = vrsqrt.pop %v399
        %v416 = vrsqrt.pop %v400
        %v417 = vrsqrt.pop %v401
        %v418 = vrsqrt.pop %v402
        %v419 = vrsqrt.pop %v403
        %v420 = vrsqrt.pop %v404
        %v421 = vrsqrt.pop %v405
        %v422 = vrsqrt.pop %v406
        %v423 = vrsqrt.pop %v407
        %v424 = vrsqrt.pop %v408
        %v425 = vrsqrt.pop %v409
        %v426 = vrsqrt.pop %v410
        %v427 = vrsqrt.pop %v411
        %v428 = vmul.f32 %v392, %v412
        %v429 = vmul.f32 %v393, %v413
        %v430 = vmul.f32 %v394, %v414
        %v431 = vmul.f32 %v395, %v415
        %v432 = vmul.f32 %v392, %v416
        %v433 = vmul.f32 %v393, %v417
        %v434 = vmul.f32 %v394, %v418
        %v435 = vmul.f32 %v395, %v419
        %v436 = vmul.f32 %v392, %v420
        %v437 = vmul.f32 %v393, %v421
        %v438 = vmul.f32 %v394, %v422
        %v439 = vmul.f32 %v395, %v423
        %v440 = vmul.f32 %v392, %v424
        %v441 = vmul.f32 %v393, %v425
        %v442 = vmul.f32 %v394, %v426
        %v443 = vmul.f32 %v395, %v427
        %445 = vset.pattern.permute.xlu0 0
        %446 = vperm.xlu0 %445, %v428
        %v447 = vpop.permute.xlu0 %446
        %450 = vset.pattern.permute.xlu0 0
        %451 = vperm.xlu0 %450, %v429
        %v452 = vpop.permute.xlu0 %451
        %455 = vset.pattern.permute.xlu0 0
        %456 = vperm.xlu0 %455, %v430
        %v457 = vpop.permute.xlu0 %456
        %460 = vset.pattern.permute.xlu0 0
        %461 = vperm.xlu0 %460, %v431
        %v462 = vpop.permute.xlu0 %461
        %465 = vset.pattern.permute.xlu0 0
        %466 = vperm.xlu0 %465, %v432
        %v467 = vpop.permute.xlu0 %466
        %470 = vset.pattern.permute.xlu0 0
        %471 = vperm.xlu0 %470, %v433
        %v472 = vpop.permute.xlu0 %471
        %475 = vset.pattern.permute.xlu0 0
        %476 = vperm.xlu0 %475, %v434
        %v477 = vpop.permute.xlu0 %476
        %480 = vset.pattern.permute.xlu0 0
        %481 = vperm.xlu0 %480, %v435
        %v482 = vpop.permute.xlu0 %481
        %485 = vset.pattern.permute.xlu0 0
        %486 = vperm.xlu0 %485, %v436
        %v487 = vpop.permute.xlu0 %486
        %490 = vset.pattern.permute.xlu0 0
        %491 = vperm.xlu0 %490, %v437
        %v492 = vpop.permute.xlu0 %491
        %495 = vset.pattern.permute.xlu0 0
        %496 = vperm.xlu0 %495, %v438
        %v497 = vpop.permute.xlu0 %496
        %500 = vset.pattern.permute.xlu0 0
        %501 = vperm.xlu0 %500, %v439
        %v502 = vpop.permute.xlu0 %501
        %505 = vset.pattern.permute.xlu0 0
        %506 = vperm.xlu0 %505, %v440
        %v507 = vpop.permute.xlu0 %506
        %510 = vset.pattern.permute.xlu0 0
        %511 = vperm.xlu0 %510, %v441
        %v512 = vpop.permute.xlu0 %511
        %515 = vset.pattern.permute.xlu0 0
        %516 = vperm.xlu0 %515, %v442
        %v517 = vpop.permute.xlu0 %516
        %520 = vset.pattern.permute.xlu0 0
        %521 = vperm.xlu0 %520, %v443
        %v522 = vpop.permute.xlu0 %521
        %v524 = vmul.f32 %v312, %v447
        %v525 = vmul.f32 %v313, %v452
        %v526 = vmul.f32 %v314, %v457
        %v527 = vmul.f32 %v315, %v462
        %v528 = vmul.f32 %v316, %v467
        %v529 = vmul.f32 %v317, %v472
        %v530 = vmul.f32 %v318, %v477
        %v531 = vmul.f32 %v319, %v482
        %v532 = vmul.f32 %v320, %v487
        %v533 = vmul.f32 %v321, %v492
        %v534 = vmul.f32 %v322, %v497
        %v535 = vmul.f32 %v323, %v502
        %v536 = vmul.f32 %v324, %v507
        %v537 = vmul.f32 %v325, %v512
        %v538 = vmul.f32 %v326, %v517
        %v539 = vmul.f32 %v327, %v522
        %v540 = vld [vmem:[%s2] sm:$0xff]
        %v541 = vld [vmem:[%s2 + $0x8] sm:$0xff]
        %v542 = vld [vmem:[%s2 + $0x10] sm:$0xff]
        %v543 = vld [vmem:[%s2 + $0x18] sm:$0xff]
        %545 = vset.pattern.permute.xlu0 0
        %546 = vperm.xlu0 %545, %v540
        %v547 = vpop.permute.xlu0 %546
        %550 = vset.pattern.permute.xlu0 0
        %551 = vperm.xlu0 %550, %v541
        %v552 = vpop.permute.xlu0 %551
        %555 = vset.pattern.permute.xlu0 0
        %556 = vperm.xlu0 %555, %v542
        %v557 = vpop.permute.xlu0 %556
        %560 = vset.pattern.permute.xlu0 0
        %561 = vperm.xlu0 %560, %v543
        %v562 = vpop.permute.xlu0 %561
        %v564 = vadd.f32 %v524, %v547
        %v565 = vadd.f32 %v525, %v552
        %v566 = vadd.f32 %v526, %v557
        %v567 = vadd.f32 %v527, %v562
        %v568 = vadd.f32 %v528, %v547
        %v569 = vadd.f32 %v529, %v552
        %v570 = vadd.f32 %v530, %v557
        %v571 = vadd.f32 %v531, %v562
        %v572 = vadd.f32 %v532, %v547
        %v573 = vadd.f32 %v533, %v552
        %v574 = vadd.f32 %v534, %v557
        %v575 = vadd.f32 %v535, %v562
        %v576 = vadd.f32 %v536, %v547
        %v577 = vadd.f32 %v537, %v552
        %v578 = vadd.f32 %v538, %v557
        %v579 = vadd.f32 %v539, %v562
        %v580 = vmax.f32 %v564, 0.0
        %v581 = vmax.f32 %v565, 0.0
        %v582 = vmax.f32 %v566, 0.0
        %v583 = vmax.f32 %v567, 0.0
        %v584 = vmax.f32 %v568, 0.0
        %v585 = vmax.f32 %v569, 0.0
        %v586 = vmax.f32 %v570, 0.0
        %v587 = vmax.f32 %v571, 0.0
        %v588 = vmax.f32 %v572, 0.0
        %v589 = vmax.f32 %v573, 0.0
        %v590 = vmax.f32 %v574, 0.0
        %v591 = vmax.f32 %v575, 0.0
        %v592 = vmax.f32 %v576, 0.0
        %v593 = vmax.f32 %v577, 0.0
        %v594 = vmax.f32 %v578, 0.0
        %v595 = vmax.f32 %v579, 0.0
        %v596 = vld [vmem:[%s3] sm:$0xff]
        %v597 = vpack.c.bf16 %v596, %v596
        %v598 = vpack.c.bf16 %v581, %v580
        %v599 = vpack.c.bf16 %v583, %v582
        %v600 = vpack.c.bf16 %v585, %v584
        %v601 = vpack.c.bf16 %v587, %v586
        %v602 = vpack.c.bf16 %v589, %v588
        %v603 = vpack.c.bf16 %v591, %v590
        %v604 = vpack.c.bf16 %v593, %v592
        %v605 = vpack.c.bf16 %v595, %v594
        %v606 = vld [vmem:[%s4] sm:$0xff]
        %608 = vset.pattern.permute.xlu0 0
        %609 = vperm.xlu0 %608, %v606
        %v610 = vpop.permute.xlu0 %609
        %vm612 = vcmask 261120
        %v614 = vsel %vm612, %v597, 0
        %616 = vmatprep.subr.bf16.mxu0 0
        %617 = vmatpush1.bf16.msra.mxu0 %v598
        %618 = vmatprep.subr.bf16.mxu0 0
        %619 = vmatpush1.bf16.msra.mxu0 %v599
        %620 = vmatprep.subr.bf16.mxu0 0
        %621 = vmatpush1.bf16.msra.mxu0 0
        %622 = vmatprep.subr.bf16.mxu0 0
        %623 = vmatpush1.bf16.msra.mxu0 0
        %624 = vmatprep.subr.bf16.mxu0 0
        %625 = vmatpush1.bf16.msra.mxu0 0
        %626 = vmatprep.subr.bf16.mxu0 0
        %627 = vmatpush1.bf16.msra.mxu0 0
        %628 = vmatprep.subr.bf16.mxu0 0
        %629 = vmatpush1.bf16.msra.mxu0 0
        %630 = vmatprep.subr.bf16.mxu0 0
        %631 = vmatpush1.bf16.msra.mxu0 0
        %632 = vmatprep.subr.bf16.mxu0 0
        %633 = vmatpush1.bf16.msra.mxu0 0
        %634 = vmatprep.subr.bf16.mxu0 0
        %635 = vmatpush1.bf16.msra.mxu0 0
        %636 = vmatprep.subr.bf16.mxu0 0
        %637 = vmatpush1.bf16.msra.mxu0 0
        %638 = vmatprep.subr.bf16.mxu0 0
        %639 = vmatpush1.bf16.msra.mxu0 0
        %640 = vmatprep.subr.bf16.mxu0 0
        %641 = vmatpush1.bf16.msra.mxu0 0
        %642 = vmatprep.subr.bf16.mxu0 0
        %643 = vmatpush1.bf16.msra.mxu0 0
        %644 = vmatprep.subr.bf16.mxu0 0
        %645 = vmatpush1.bf16.msra.mxu0 0
        %646 = vmatprep.subr.bf16.mxu0 0
        %647 = vmatpush1.bf16.msra.mxu0 0
        %648 = vmatprep.mubr.bf16.mxu0 0
        %649 = vmatmul.mubr.bf16.gmra.mrb[0].mxu0 %v614
        %v650 = vpop.f32.mrb[0].mxu0
        %v651 = vadd.f32 %v610, %v650
        %v652 = vpop.f32.mrb[0].mxu0
        %v653 = vpop.f32.mrb[0].mxu0
        %v654 = vpop.f32.mrb[0].mxu0
        %655 = vdwg.mxu0
        %656 = vmatprep.subr.bf16.mxu0 0
        %657 = vmatpush1.bf16.msra.mxu0 %v600
        %658 = vmatprep.subr.bf16.mxu0 0
        %659 = vmatpush1.bf16.msra.mxu0 %v601
        %660 = vmatprep.subr.bf16.mxu0 0
        %661 = vmatpush1.bf16.msra.mxu0 0
        %662 = vmatprep.subr.bf16.mxu0 0
        %663 = vmatpush1.bf16.msra.mxu0 0
        %664 = vmatprep.subr.bf16.mxu0 0
        %665 = vmatpush1.bf16.msra.mxu0 0
        %666 = vmatprep.subr.bf16.mxu0 0
        %667 = vmatpush1.bf16.msra.mxu0 0
        %668 = vmatprep.subr.bf16.mxu0 0
        %669 = vmatpush1.bf16.msra.mxu0 0
        %670 = vmatprep.subr.bf16.mxu0 0
        %671 = vmatpush1.bf16.msra.mxu0 0
        %672 = vmatprep.subr.bf16.mxu0 0
        %673 = vmatpush1.bf16.msra.mxu0 0
        %674 = vmatprep.subr.bf16.mxu0 0
        %675 = vmatpush1.bf16.msra.mxu0 0
        %676 = vmatprep.subr.bf16.mxu0 0
        %677 = vmatpush1.bf16.msra.mxu0 0
        %678 = vmatprep.subr.bf16.mxu0 0
        %679 = vmatpush1.bf16.msra.mxu0 0
        %680 = vmatprep.subr.bf16.mxu0 0
        %681 = vmatpush1.bf16.msra.mxu0 0
        %682 = vmatprep.subr.bf16.mxu0 0
        %683 = vmatpush1.bf16.msra.mxu0 0
        %684 = vmatprep.subr.bf16.mxu0 0
        %685 = vmatpush1.bf16.msra.mxu0 0
        %686 = vmatprep.subr.bf16.mxu0 0
        %687 = vmatpush1.bf16.msra.mxu0 0
        %688 = vmatprep.mubr.bf16.mxu0 0
        %689 = vmatmul.mubr.bf16.gmra.mrb[0].mxu0 %v614
        %v690 = vpop.f32.mrb[0].mxu0
        %v691 = vadd.f32 %v610, %v690
        %v692 = vpop.f32.mrb[0].mxu0
        %v693 = vpop.f32.mrb[0].mxu0
        %v694 = vpop.f32.mrb[0].mxu0
        %695 = vdwg.mxu0
        %696 = vmatprep.subr.bf16.mxu0 0
        %697 = vmatpush1.bf16.msra.mxu0 %v602
        %698 = vmatprep.subr.bf16.mxu0 0
        %699 = vmatpush1.bf16.msra.mxu0 %v603
        %700 = vmatprep.subr.bf16.mxu0 0
        %701 = vmatpush1.bf16.msra.mxu0 0
        %702 = vmatprep.subr.bf16.mxu0 0
        %703 = vmatpush1.bf16.msra.mxu0 0
        %704 = vmatprep.subr.bf16.mxu0 0
        %705 = vmatpush1.bf16.msra.mxu0 0
        %706 = vmatprep.subr.bf16.mxu0 0
        %707 = vmatpush1.bf16.msra.mxu0 0
        %708 = vmatprep.subr.bf16.mxu0 0
        %709 = vmatpush1.bf16.msra.mxu0 0
        %710 = vmatprep.subr.bf16.mxu0 0
        %711 = vmatpush1.bf16.msra.mxu0 0
        %712 = vmatprep.subr.bf16.mxu0 0
        %713 = vmatpush1.bf16.msra.mxu0 0
        %714 = vmatprep.subr.bf16.mxu0 0
        %715 = vmatpush1.bf16.msra.mxu0 0
        %716 = vmatprep.subr.bf16.mxu0 0
        %717 = vmatpush1.bf16.msra.mxu0 0
        %718 = vmatprep.subr.bf16.mxu0 0
        %719 = vmatpush1.bf16.msra.mxu0 0
        %720 = vmatprep.subr.bf16.mxu0 0
        %721 = vmatpush1.bf16.msra.mxu0 0
        %722 = vmatprep.subr.bf16.mxu0 0
        %723 = vmatpush1.bf16.msra.mxu0 0
        %724 = vmatprep.subr.bf16.mxu0 0
        %725 = vmatpush1.bf16.msra.mxu0 0
        %726 = vmatprep.subr.bf16.mxu0 0
        %727 = vmatpush1.bf16.msra.mxu0 0
        %728 = vmatprep.mubr.bf16.mxu0 0
        %729 = vmatmul.mubr.bf16.gmra.mrb[0].mxu0 %v614
        %v730 = vpop.f32.mrb[0].mxu0
        %v731 = vadd.f32 %v610, %v730
        %v732 = vpop.f32.mrb[0].mxu0
        %v733 = vpop.f32.mrb[0].mxu0
        %v734 = vpop.f32.mrb[0].mxu0
        %735 = vdwg.mxu0
        %736 = vmatprep.subr.bf16.mxu0 0
        %737 = vmatpush1.bf16.msra.mxu0 %v604
        %738 = vmatprep.subr.bf16.mxu0 0
        %739 = vmatpush1.bf16.msra.mxu0 %v605
        %740 = vmatprep.subr.bf16.mxu0 0
        %741 = vmatpush1.bf16.msra.mxu0 0
        %742 = vmatprep.subr.bf16.mxu0 0
        %743 = vmatpush1.bf16.msra.mxu0 0
        %744 = vmatprep.subr.bf16.mxu0 0
        %745 = vmatpush1.bf16.msra.mxu0 0
        %746 = vmatprep.subr.bf16.mxu0 0
        %747 = vmatpush1.bf16.msra.mxu0 0
        %748 = vmatprep.subr.bf16.mxu0 0
        %749 = vmatpush1.bf16.msra.mxu0 0
        %750 = vmatprep.subr.bf16.mxu0 0
        %751 = vmatpush1.bf16.msra.mxu0 0
        %752 = vmatprep.subr.bf16.mxu0 0
        %753 = vmatpush1.bf16.msra.mxu0 0
        %754 = vmatprep.subr.bf16.mxu0 0
        %755 = vmatpush1.bf16.msra.mxu0 0
        %756 = vmatprep.subr.bf16.mxu0 0
        %757 = vmatpush1.bf16.msra.mxu0 0
        %758 = vmatprep.subr.bf16.mxu0 0
        %759 = vmatpush1.bf16.msra.mxu0 0
        %760 = vmatprep.subr.bf16.mxu0 0
        %761 = vmatpush1.bf16.msra.mxu0 0
        %762 = vmatprep.subr.bf16.mxu0 0
        %763 = vmatpush1.bf16.msra.mxu0 0
        %764 = vmatprep.subr.bf16.mxu0 0
        %765 = vmatpush1.bf16.msra.mxu0 0
        %766 = vmatprep.subr.bf16.mxu0 0
        %767 = vmatpush1.bf16.msra.mxu0 0
        %768 = vmatprep.mubr.bf16.mxu0 0
        %769 = vmatmul.mubr.bf16.gmra.mrb[0].mxu0 %v614
        %v770 = vpop.f32.mrb[0].mxu0
        %v771 = vadd.f32 %v610, %v770
        %v772 = vpop.f32.mrb[0].mxu0
        %v773 = vpop.f32.mrb[0].mxu0
        %v774 = vpop.f32.mrb[0].mxu0
        %775 = vdwg.mxu0
        %776 = vmax.xlane.f32.xlu0 %v651
        %v777 = vpop.xlane.xlu0 %776
        %778 = vmax.xlane.f32.xlu0 %v691
        %v779 = vpop.xlane.xlu0 %778
        %780 = vmax.xlane.f32.xlu0 %v731
        %v781 = vpop.xlane.xlu0 %780
        %782 = vmax.xlane.f32.xlu0 %v771
        %v783 = vpop.xlane.xlu0 %782
        %v784 = vsub.f32 %v651, %v777
        %v785 = vsub.f32 %v691, %v779
        %v786 = vsub.f32 %v731, %v781
        %v787 = vsub.f32 %v771, %v783
        %v788 = vmul.f32 %v784, 1.442695
        %v789 = vpow.pop %v788
        %v790 = vmul.f32 %v785, 1.442695
        %v791 = vpow.pop %v790
        %v792 = vmul.f32 %v786, 1.442695
        %v793 = vpow.pop %v792
        %v794 = vmul.f32 %v787, 1.442695
        %v795 = vpow.pop %v794
        %796 = vadd.xlane.f32.xlu0 %v789
        %v797 = vpop.xlane.xlu0 %796
        %798 = vadd.xlane.f32.xlu0 %v791
        %v799 = vpop.xlane.xlu0 %798
        %800 = vadd.xlane.f32.xlu0 %v793
        %v801 = vpop.xlane.xlu0 %800
        %802 = vadd.xlane.f32.xlu0 %v795
        %v803 = vpop.xlane.xlu0 %802
        %v804 = vrcp.pop %v797
        %v805 = vrcp.pop %v799
        %v806 = vrcp.pop %v801
        %v807 = vrcp.pop %v803
        %v808 = vmul.f32 %v789, %v804
        %v809 = vmul.f32 %v791, %v805
        %v810 = vmul.f32 %v793, %v806
        %v811 = vmul.f32 %v795, %v807
        %v812 = vpack.c.bf16 %v808, %v808
        %v813 = vpack.c.bf16 %v809, %v809
        %v814 = vpack.c.bf16 %v810, %v810
        %v815 = vpack.c.bf16 %v811, %v811
        %v816 = vpack.c.bf16 %v248, %v247
        %v817 = vpack.c.bf16 %v250, %v249
        %v818 = vpack.c.bf16 %v252, %v251
        %v819 = vpack.c.bf16 %v254, %v253
        %v820 = vpack.c.bf16 %v256, %v255
        %v821 = vpack.c.bf16 %v258, %v257
        %v822 = vpack.c.bf16 %v260, %v259
        %v823 = vpack.c.bf16 %v262, %v261
        %824 = vmatprep.subr.bf16.mxu0 0
        %825 = vmatpush1.bf16.xpose.msra.mxu0 %v816
        %826 = vmatprep.subr.bf16.mxu0 0
        %827 = vmatpush1.bf16.xpose.msra.mxu0 %v817
        %828 = vmatprep.subr.bf16.mxu0 0
        %829 = vmatpush1.bf16.xpose.msra.mxu0 0
        %830 = vmatprep.subr.bf16.mxu0 0
        %831 = vmatpush1.bf16.xpose.msra.mxu0 0
        %832 = vmatprep.subr.bf16.mxu0 0
        %833 = vmatpush1.bf16.xpose.msra.mxu0 0
        %834 = vmatprep.subr.bf16.mxu0 0
        %835 = vmatpush1.bf16.xpose.msra.mxu0 0
        %836 = vmatprep.subr.bf16.mxu0 0
        %837 = vmatpush1.bf16.xpose.msra.mxu0 0
        %838 = vmatprep.subr.bf16.mxu0 0
        %839 = vmatpush1.bf16.xpose.msra.mxu0 0
        %840 = vmatprep.subr.bf16.mxu0 0
        %841 = vmatpush1.bf16.xpose.msra.mxu0 0
        %842 = vmatprep.subr.bf16.mxu0 0
        %843 = vmatpush1.bf16.xpose.msra.mxu0 0
        %844 = vmatprep.subr.bf16.mxu0 0
        %845 = vmatpush1.bf16.xpose.msra.mxu0 0
        %846 = vmatprep.subr.bf16.mxu0 0
        %847 = vmatpush1.bf16.xpose.msra.mxu0 0
        %848 = vmatprep.subr.bf16.mxu0 0
        %849 = vmatpush1.bf16.xpose.msra.mxu0 0
        %850 = vmatprep.subr.bf16.mxu0 0
        %851 = vmatpush1.bf16.xpose.msra.mxu0 0
        %852 = vmatprep.subr.bf16.mxu0 0
        %853 = vmatpush1.bf16.xpose.msra.mxu0 0
        %854 = vmatprep.subr.bf16.mxu0 0
        %855 = vmatpush1.bf16.xpose.msra.mxu0 0
        %856 = vmatprep.mubr.bf16.mxu0 0
        %857 = vmatmul.mubr.bf16.gmra.mrb[0].mxu0 %v812
        %v858 = vpop.f32.mrb[0].mxu0
        %v859 = vadd.f32 0.0, %v858
        %v860 = vpop.f32.mrb[0].mxu0
        %v861 = vpop.f32.mrb[0].mxu0
        %v862 = vpop.f32.mrb[0].mxu0
        %863 = vdwg.mxu0
        %864 = vmatprep.subr.bf16.mxu0 0
        %865 = vmatpush1.bf16.xpose.msra.mxu0 %v818
        %866 = vmatprep.subr.bf16.mxu0 0
        %867 = vmatpush1.bf16.xpose.msra.mxu0 %v819
        %868 = vmatprep.subr.bf16.mxu0 0
        %869 = vmatpush1.bf16.xpose.msra.mxu0 0
        %870 = vmatprep.subr.bf16.mxu0 0
        %871 = vmatpush1.bf16.xpose.msra.mxu0 0
        %872 = vmatprep.subr.bf16.mxu0 0
        %873 = vmatpush1.bf16.xpose.msra.mxu0 0
        %874 = vmatprep.subr.bf16.mxu0 0
        %875 = vmatpush1.bf16.xpose.msra.mxu0 0
        %876 = vmatprep.subr.bf16.mxu0 0
        %877 = vmatpush1.bf16.xpose.msra.mxu0 0
        %878 = vmatprep.subr.bf16.mxu0 0
        %879 = vmatpush1.bf16.xpose.msra.mxu0 0
        %880 = vmatprep.subr.bf16.mxu0 0
        %881 = vmatpush1.bf16.xpose.msra.mxu0 0
        %882 = vmatprep.subr.bf16.mxu0 0
        %883 = vmatpush1.bf16.xpose.msra.mxu0 0
        %884 = vmatprep.subr.bf16.mxu0 0
        %885 = vmatpush1.bf16.xpose.msra.mxu0 0
        %886 = vmatprep.subr.bf16.mxu0 0
        %887 = vmatpush1.bf16.xpose.msra.mxu0 0
        %888 = vmatprep.subr.bf16.mxu0 0
        %889 = vmatpush1.bf16.xpose.msra.mxu0 0
        %890 = vmatprep.subr.bf16.mxu0 0
        %891 = vmatpush1.bf16.xpose.msra.mxu0 0
        %892 = vmatprep.subr.bf16.mxu0 0
        %893 = vmatpush1.bf16.xpose.msra.mxu0 0
        %894 = vmatprep.subr.bf16.mxu0 0
        %895 = vmatpush1.bf16.xpose.msra.mxu0 0
        %896 = vmatprep.mubr.bf16.mxu0 0
        %897 = vmatmul.mubr.bf16.gmra.mrb[0].mxu0 %v813
        %v898 = vpop.f32.mrb[0].mxu0
        %v899 = vadd.f32 0.0, %v898
        %v900 = vpop.f32.mrb[0].mxu0
        %v901 = vpop.f32.mrb[0].mxu0
        %v902 = vpop.f32.mrb[0].mxu0
        %903 = vdwg.mxu0
        %904 = vmatprep.subr.bf16.mxu0 0
        %905 = vmatpush1.bf16.xpose.msra.mxu0 %v820
        %906 = vmatprep.subr.bf16.mxu0 0
        %907 = vmatpush1.bf16.xpose.msra.mxu0 %v821
        %908 = vmatprep.subr.bf16.mxu0 0
        %909 = vmatpush1.bf16.xpose.msra.mxu0 0
        %910 = vmatprep.subr.bf16.mxu0 0
        %911 = vmatpush1.bf16.xpose.msra.mxu0 0
        %912 = vmatprep.subr.bf16.mxu0 0
        %913 = vmatpush1.bf16.xpose.msra.mxu0 0
        %914 = vmatprep.subr.bf16.mxu0 0
        %915 = vmatpush1.bf16.xpose.msra.mxu0 0
        %916 = vmatprep.subr.bf16.mxu0 0
        %917 = vmatpush1.bf16.xpose.msra.mxu0 0
        %918 = vmatprep.subr.bf16.mxu0 0
        %919 = vmatpush1.bf16.xpose.msra.mxu0 0
        %920 = vmatprep.subr.bf16.mxu0 0
        %921 = vmatpush1.bf16.xpose.msra.mxu0 0
        %922 = vmatprep.subr.bf16.mxu0 0
        %923 = vmatpush1.bf16.xpose.msra.mxu0 0
        %924 = vmatprep.subr.bf16.mxu0 0
        %925 = vmatpush1.bf16.xpose.msra.mxu0 0
        %926 = vmatprep.subr.bf16.mxu0 0
        %927 = vmatpush1.bf16.xpose.msra.mxu0 0
        %928 = vmatprep.subr.bf16.mxu0 0
        %929 = vmatpush1.bf16.xpose.msra.mxu0 0
        %930 = vmatprep.subr.bf16.mxu0 0
        %931 = vmatpush1.bf16.xpose.msra.mxu0 0
        %932 = vmatprep.subr.bf16.mxu0 0
        %933 = vmatpush1.bf16.xpose.msra.mxu0 0
        %934 = vmatprep.subr.bf16.mxu0 0
        %935 = vmatpush1.bf16.xpose.msra.mxu0 0
        %936 = vmatprep.mubr.bf16.mxu0 0
        %937 = vmatmul.mubr.bf16.gmra.mrb[0].mxu0 %v814
        %v938 = vpop.f32.mrb[0].mxu0
        %v939 = vadd.f32 0.0, %v938
        %v940 = vpop.f32.mrb[0].mxu0
        %v941 = vpop.f32.mrb[0].mxu0
        %v942 = vpop.f32.mrb[0].mxu0
        %943 = vdwg.mxu0
        %944 = vmatprep.subr.bf16.mxu0 0
        %945 = vmatpush1.bf16.xpose.msra.mxu0 %v822
        %946 = vmatprep.subr.bf16.mxu0 0
        %947 = vmatpush1.bf16.xpose.msra.mxu0 %v823
        %948 = vmatprep.subr.bf16.mxu0 0
        %949 = vmatpush1.bf16.xpose.msra.mxu0 0
        %950 = vmatprep.subr.bf16.mxu0 0
        %951 = vmatpush1.bf16.xpose.msra.mxu0 0
        %952 = vmatprep.subr.bf16.mxu0 0
        %953 = vmatpush1.bf16.xpose.msra.mxu0 0
        %954 = vmatprep.subr.bf16.mxu0 0
        %955 = vmatpush1.bf16.xpose.msra.mxu0 0
        %956 = vmatprep.subr.bf16.mxu0 0
        %957 = vmatpush1.bf16.xpose.msra.mxu0 0
        %958 = vmatprep.subr.bf16.mxu0 0
        %959 = vmatpush1.bf16.xpose.msra.mxu0 0
        %960 = vmatprep.subr.bf16.mxu0 0
        %961 = vmatpush1.bf16.xpose.msra.mxu0 0
        %962 = vmatprep.subr.bf16.mxu0 0
        %963 = vmatpush1.bf16.xpose.msra.mxu0 0
        %964 = vmatprep.subr.bf16.mxu0 0
        %965 = vmatpush1.bf16.xpose.msra.mxu0 0
        %966 = vmatprep.subr.bf16.mxu0 0
        %967 = vmatpush1.bf16.xpose.msra.mxu0 0
        %968 = vmatprep.subr.bf16.mxu0 0
        %969 = vmatpush1.bf16.xpose.msra.mxu0 0
        %970 = vmatprep.subr.bf16.mxu0 0
        %971 = vmatpush1.bf16.xpose.msra.mxu0 0
        %972 = vmatprep.subr.bf16.mxu0 0
        %973 = vmatpush1.bf16.xpose.msra.mxu0 0
        %974 = vmatprep.subr.bf16.mxu0 0
        %975 = vmatpush1.bf16.xpose.msra.mxu0 0
        %976 = vmatprep.mubr.bf16.mxu0 0
        %977 = vmatmul.mubr.bf16.gmra.mrb[0].mxu0 %v815
        %v978 = vpop.f32.mrb[0].mxu0
        %v979 = vadd.f32 0.0, %v978
        %v980 = vpop.f32.mrb[0].mxu0
        %v981 = vpop.f32.mrb[0].mxu0
        %v982 = vpop.f32.mrb[0].mxu0
        %983 = vdwg.mxu0
        %984 = vst.msk [vmem:[%s243] sm:$0xff] %vm612, %v859
        %985 = vst.msk [vmem:[%s243 + $0x8] sm:$0xff] %vm612, %v899
        %986 = vst.msk [vmem:[%s243 + $0x10] sm:$0xff] %vm612, %v939
        %987 = vst.msk [vmem:[%s243 + $0x18] sm:$0xff] %vm612, %v979
        %s988 = sand.u32 %s140, 1
        %s989 = scalar_lea.sflag [#allocation4], %s988
        %s990 = sand.u32 %s140, 1
        %s991 = smul.addr %s990, 32
        %s992 = scalar_lea.vmem [#allocation5], %s991
        // Predicated region
        $region45: #{diff_pool_forward.1} parent=39 // pred_check
          %p993 = pneg %p150
        $region46: #{diff_pool_forward.1} parent=39 // pred_check_branch
          %995 = sbr.rel (%p993) target = $region48
        $region47: #{diff_pool_forward.1} parent=39 // pred_region
          %s996 = smul.u32 4, %s22
          %s998 = ssub.s32 512, 512
          %999 = vsyncadd %s989, %s998
          %s1000 = smul.addr %s996, 128
          %s1001 = scalar_lea.hbm %s5, %s1000
          %s1002 = sshll.u32 %s992, 4
          %s1003 = int_to_ptr.vmem [resolvable:$true] %s1002
          %1008 = dma.vmem_to_hbm [thread:$0]  %s1003, 512, %s1001, %s989, 128, 128, 8
        $region48: #{diff_pool_forward.1} parent=39 // pred_fallthru
          _
      $region40: #{diff_pool_forward.1} parent=5 // pred_fallthru
        _
      %p1009 = scmp.le.s32.totalorder 2, %s17
      // Predicated region
      $region49: #{diff_pool_forward.1} parent=5 // pred_check
        %p1010 = pneg %p1009
      $region50: #{diff_pool_forward.1} parent=5 // pred_check_branch
        %1012 = sbr.rel (%p1010) target = $region52
      $region51: #{diff_pool_forward.1} parent=5 // pred_region
        %s1013 = ssub.s32 %s17, 2
        // Predicated region
        $region53: #{diff_pool_forward.1} parent=51 // pred_check
          %p1014 = pneg %p156
        $region54: #{diff_pool_forward.1} parent=51 // pred_check_branch
          %1016 = sbr.rel (%p1014) target = $region56
        $region55: #{diff_pool_forward.1} parent=51 // pred_region
          %s1017 = sand.u32 %s141, 1
          %s1018 = scalar_lea.sflag [#allocation4], %s1017
          %s1019 = sand.u32 %s141, 1
          %s1020 = smul.addr %s1019, 32
          %s1021 = scalar_lea.vmem [#allocation5], %s1020
          %1022 = dma.done %s1018, 512
        $region56: #{diff_pool_forward.1} parent=51 // pred_fallthru
          _
      $region52: #{diff_pool_forward.1} parent=5 // pred_fallthru
        _
    $region6: #{diff_pool_forward.1} parent=1 // loop_footer
      %s21 = sadd.s32 1, %s17
    $region7: #{diff_pool_forward.1} parent=1 // loop_footer_branch
      %16 = sbr.rel target = $region3
    $region8: #{diff_pool_forward.1} parent=1 // loop_exit
      _
    %1023 = vsyncpa [#allocation3], 1
    %s1024 = scalar_lea.sflag [#allocation3], 1
    %1025 = vsyncpa %s1024, 1
    %1026 = vsyncpa [#allocation4], 1
    %s1027 = scalar_lea.sflag [#allocation4], 1
    %1028 = vsyncpa %s1027, 1

</llo_original>
